<compile_context>
chip_gen: v6e
topology: v6e:2x2x1
jax: 0.10.0
libtpu: 0.0.40
codegen_flags: <defaults>
</compile_context>

<pallas_src>
import jax
import jax.numpy as jnp
from jax.experimental import pallas as pl
from jax.experimental.pallas import tpu as pltpu


def _drop_path_kernel(scale_ref, x_ref, o_ref):
    # scale_ref: (bn, 1) per-sample scale (0 or 1/keep_prob)
    # x_ref / o_ref: (bn, f_chunk) activations
    o_ref[...] = x_ref[...] * scale_ref[...]


def drop_path(x, key, drop_prob=0.0, scale_by_keep=True, training=True,
              donate_x=False):
    """JAX/Pallas equivalent of DropPath.forward (PyTorch semantics)."""
    if drop_prob == 0.0 or not training:
        return x
    keep_prob = 1.0 - drop_prob

    n = x.shape[0]
    f = 1
    for d in x.shape[1:]:
        f *= d

    # Per-sample Bernoulli(keep_prob) mask and 1/keep_prob scaling, computed in
    # plain JAX (N scalars -> trivially cheap); kernel only does the broadcast mul.
    keep = jax.random.bernoulli(key, p=keep_prob, shape=(n,))
    scale_val = (1.0 / keep_prob) if (scale_by_keep and keep_prob > 0.0) else 1.0
    scale = jnp.where(keep, jnp.asarray(scale_val, jnp.float32), 0.0)
    scale = scale.astype(x.dtype).reshape(n, 1)

    # Lane-dense, flattened per-sample view: (N, F) with F = prod(feature dims).
    xf = x.reshape(n, f)

    # --- block sizing --------------------------------------------------------
    itemsize = jnp.dtype(x.dtype).itemsize

    # Rows per block: fill whole sublanes for packed dtypes (f32->8, bf16->16,
    # int8/fp8->32). Full-n block is always legal when n is small.
    sublane_rows = max(8, (8 * 4) // max(itemsize, 1))
    bn = n if n <= sublane_rows else sublane_rows

    # Feature chunk: multiple of 128, targeting ~4 MiB per activation block so
    # the HBM pipe stays saturated and per-step (~0.35 us) overhead is
    # amortized. Double-buffered in + out => ~16 MiB VMEM, within the 32 MiB
    # budget below on every generation (incl. v7x's 64 MiB physical VMEM).
    target_elems = (4 << 20) // max(itemsize, 1)
    if f <= 128:
        f_chunk = f  # full-dim block is always legal
    else:
        target = max(128, (target_elems // max(bn, 1)) // 128 * 128)
        if target >= f:
            f_chunk = f  # whole feature row fits the block budget
        else:
            # Ragged last tile along the feature axis is fine (pl.cdiv grid);
            # never fall back to a giant full-F block.
            f_chunk = min(target, (f // 128) * 128)

    grid = (pl.cdiv(n, bn), pl.cdiv(f, f_chunk))

    cost = pl.CostEstimate(
        flops=n * f,
        transcendentals=0,
        bytes_accessed=2 * n * f * itemsize + n * itemsize,
    )

    out = pl.pallas_call(
        _drop_path_kernel,
        out_shape=jax.ShapeDtypeStruct((n, f), x.dtype),
        grid=grid,
        in_specs=[
            pl.BlockSpec((bn, 1), lambda i, j: (i, 0)),        # per-sample scale
            pl.BlockSpec((bn, f_chunk), lambda i, j: (i, j)),  # activations
        ],
        out_specs=pl.BlockSpec((bn, f_chunk), lambda i, j: (i, j)),
        compiler_params=pltpu.CompilerParams(
            dimension_semantics=("parallel", "parallel"),
            vmem_limit_bytes=32 * 1024 * 1024,
        ),
        cost_estimate=cost,
        # Alias x -> out only when the caller can donate x; aliasing a
        # non-donated input makes XLA insert a defensive copy (worse).
        input_output_aliases=({1: 0} if donate_x else {}),
    )(scale, xf)

    return out.reshape(x.shape)


if __name__ == "__main__":
    key = jax.random.PRNGKey(0)
    xkey, mkey = jax.random.split(key)

    # Small NCHW input consistent with ConvNeXt-style usage.
    x = jax.random.normal(xkey, (2, 4, 16, 16), dtype=jnp.float32)

    drop_prob = 0.25
    keep_prob = 1.0 - drop_prob

    # Training path: per-sample mask scaled by 1/keep_prob.
    y = drop_path(x, mkey, drop_prob=drop_prob, scale_by_keep=True, training=True)
    y = jax.block_until_ready(y)

    # Sanity check: each sample is either all-zero or x / keep_prob.
    ok = True
    for b in range(x.shape[0]):
        yb = y[b]
        xb = x[b] / keep_prob
        is_zero = bool(jnp.allclose(yb, 0.0))
        is_scaled = bool(jnp.allclose(yb, xb, atol=1e-5, rtol=1e-5))
        ok = ok and (is_zero or is_scaled)

    # Eval path / drop_prob == 0: identity.
    y_eval = drop_path(x, mkey, drop_prob=drop_prob, training=False)
    ok = ok and bool(jnp.allclose(y_eval, x))
    y_zero = drop_path(x, mkey, drop_prob=0.0, training=True)
    ok = ok and bool(jnp.allclose(y_zero, x))

    # Also exercise a packed dtype / ragged-F path (bf16, F not multiple of 128).
    xb16 = jax.random.normal(xkey, (3, 5, 10, 10), dtype=jnp.bfloat16)
    yb16 = jax.block_until_ready(
        drop_path(xb16, mkey, drop_prob=drop_prob, training=True))
    for b in range(xb16.shape[0]):
        ref = (xb16[b].astype(jnp.float32) / keep_prob).astype(jnp.bfloat16)
        is_zero = bool(jnp.allclose(yb16[b].astype(jnp.float32), 0.0))
        is_scaled = bool(jnp.allclose(yb16[b].astype(jnp.float32),
                                      ref.astype(jnp.float32),
                                      atol=1e-2, rtol=1e-2))
        ok = ok and (is_zero or is_scaled)

    if ok:
        print("KERNEL_OK")
    else:
        raise SystemExit("DropPath kernel output mismatch")
</pallas_src>

<mosaic_0001>
module attributes {stable_mosaic.version = 11 : i64} {
  func.func @_drop_path_kernel(%arg0: i32, %arg1: i32, %arg2: memref<2x1xf32, #tpu.memory_space<vmem>>, %arg3: memref<2x1024xf32, #tpu.memory_space<vmem>>, %arg4: memref<2x1024xf32, #tpu.memory_space<vmem>>) attributes {dimension_semantics = [#tpu.dimension_semantics<parallel>, #tpu.dimension_semantics<parallel>], iteration_bounds = array<i64: 1, 1>, scalar_prefetch = 0 : i64, scratch_operands = 0 : i64, tpu.core_type = #tpu.core_type<tc>, window_params = [{transform_indices = @transform_0, window_bounds = array<i64: 2, 1>}, {transform_indices = @transform_1, window_bounds = array<i64: 2, 1024>}, {transform_indices = @transform_2, window_bounds = array<i64: 2, 1024>}]} {
    %c0 = arith.constant 0 : index
    %c0_0 = arith.constant 0 : index
    %0 = vector.load %arg3[%c0, %c0_0] : memref<2x1024xf32, #tpu.memory_space<vmem>>, vector<2x1024xf32>
    %c0_1 = arith.constant 0 : index
    %c0_2 = arith.constant 0 : index
    %1 = vector.load %arg2[%c0_1, %c0_2] : memref<2x1xf32, #tpu.memory_space<vmem>>, vector<2x1xf32>
    %2 = vector.broadcast %1 : vector<2x1xf32> to vector<2x1024xf32>
    %3 = arith.mulf %0, %2 : vector<2x1024xf32>
    %c0_3 = arith.constant 0 : index
    %c0_4 = arith.constant 0 : index
    %4 = vector.load %arg4[%c0_3, %c0_4] : memref<2x1024xf32, #tpu.memory_space<vmem>>, vector<2x1024xf32>
    tpu.vector_store %arg4[%c0_3, %c0_4], %3 {strides = array<i32>} : memref<2x1024xf32, #tpu.memory_space<vmem>>, vector<2x1024xf32>,
    return
  }
  func.func @transform_0(%arg0: i32, %arg1: i32) -> (i32, i32) {
    %c0_i32 = arith.constant 0 : i32
    %c0_i32_0 = arith.constant 0 : i32
    return %arg0, %c0_i32 : i32, i32
  }
  func.func @transform_1(%arg0: i32, %arg1: i32) -> (i32, i32) {
    %c0_i32 = arith.constant 0 : i32
    return %arg0, %arg1 : i32, i32
  }
  func.func @transform_2(%arg0: i32, %arg1: i32) -> (i32, i32) {
    %c0_i32 = arith.constant 0 : i32
    return %arg0, %arg1 : i32, i32
  }
}

</mosaic_0001>

<llo_original>
// kernel: tpu_custom_call.1
$region0: #{tpu_custom_call.1}
  #allocation0 [shape = 'u32[]', space=smem, size = 0x4, offset = 0x4, fixed_abs, tag = 'smem constant byte address 0x4 - core index']
  #allocation1 [shape = 'u32[144,128]{1,0:T(1,128)}', space=vmem, size = 0x12000, scoped, tag = 'internal scratch']
  %s0 = inlined_call_operand.vmem [shape: f32[2,1], index: 0, kind: input, shape index: {}]
  %s1 = inlined_call_operand.hbm [shape: f32[2,1024], index: 1, kind: input, shape index: {}]
  %s2 = inlined_call_operand.hbm [shape: f32[2,1024], index: 2, kind: output, shape index: {}]
  %s3 = sld [smem:[#allocation0]]
  $region22: #{tpu_custom_call.1} parent=0
    _
  %s5 = ssub.s32 1, %s3
  %s6 = scalar_select 0, %s5, %s3
  $region1: #{tpu_custom_call.1} parent=0
    #allocation2 [shape = 'u8[8192]{0}', space=vmem, size = 0x2000, scoped, tag = 'input window, operand 1, single buffered']
    #allocation3 [shape = 's32[1]{0}', space=sflag, size = 0x4, scoped, tag = 'scoped memory for tpu_custom_call.1']
    #allocation4 [shape = 's32[1]{0}', space=sflag, size = 0x4, scoped, tag = 'scoped memory for tpu_custom_call.1']
    #allocation5 [shape = 'u8[8192]{0}', space=vmem, size = 0x2000, scoped, tag = 'output window, operand 0, single buffered']
    %7 = vsyncpa [#allocation3], 0
    %8 = vsyncpa [#allocation4], 0
    // Predicated region
    $region2: #{tpu_custom_call.1} parent=1 // pred_check
      _
    $region3: #{tpu_custom_call.1} parent=1 // pred_check_branch
      %10 = sbr.rel (0) target = $region5
    $region4: #{tpu_custom_call.1} parent=1 // pred_region
      _
    $region5: #{tpu_custom_call.1} parent=1 // pred_fallthru
      _
    // Predicated region
    $region6: #{tpu_custom_call.1} parent=1 // pred_check
      _
    $region7: #{tpu_custom_call.1} parent=1 // pred_check_branch
      %12 = sbr.rel (0) target = $region9
    $region8: #{tpu_custom_call.1} parent=1 // pred_region
      %s14 = ssub.s32 256, 256
      %15 = vsyncadd [#allocation3], %s14
      %s17 = sshll.u32 [#allocation2], 4
      %s18 = int_to_ptr.vmem [resolvable:$true] %s17
      %20 = dma.hbm_to_vmem [thread:$0]  %s1, 256, %s18, [#allocation3]
    $region9: #{tpu_custom_call.1} parent=1 // pred_fallthru
      _
    // Predicated region
    $region10: #{tpu_custom_call.1} parent=1 // pred_check
      _
    $region11: #{tpu_custom_call.1} parent=1 // pred_check_branch
      %22 = sbr.rel (0) target = $region13
    $region12: #{tpu_custom_call.1} parent=1 // pred_region
      %23 = dma.done [#allocation3], 256
    $region13: #{tpu_custom_call.1} parent=1 // pred_fallthru
      _
    %v24 = vld [vmem:[#allocation2] sm:$0xff]
    %v25 = vld [vmem:[#allocation2 + $0x8] sm:$0xff]
    %v26 = vld [vmem:[%s0] sm:$0x3]
    %28 = vset.pattern.permute.xlu0 0
    %29 = vperm.xlu0 %28, %v26
    %v30 = vpop.permute.xlu0 %29
    %v32 = vunpack.c.l.s4 269488144
    %v33 = vunpack.c.0.s8 %v32
    %v34 = vlaneseq
    %v35 = vshrl.u32 %v34, 7
    %v36 = vsub.s32 %v33, %v35
    %v37 = vrot.slane %v30, %v36
    %v39 = vmul.f32 %v24, %v37
    %v40 = vmul.f32 %v25, %v37
    %41 = vst [vmem:[#allocation5] sm:$0xff] %v39
    %42 = vst [vmem:[#allocation5 + $0x8] sm:$0xff] %v40
    // Predicated region
    $region14: #{tpu_custom_call.1} parent=1 // pred_check
      _
    $region15: #{tpu_custom_call.1} parent=1 // pred_check_branch
      %44 = sbr.rel (0) target = $region17
    $region16: #{tpu_custom_call.1} parent=1 // pred_region
      %s46 = ssub.s32 256, 256
      %47 = vsyncadd [#allocation4], %s46
      %s49 = sshll.u32 [#allocation5], 4
      %s50 = int_to_ptr.vmem [resolvable:$true] %s49
      %52 = dma.vmem_to_hbm [thread:$0]  %s50, 256, %s2, [#allocation4]
    $region17: #{tpu_custom_call.1} parent=1 // pred_fallthru
      _
    // Predicated region
    $region18: #{tpu_custom_call.1} parent=1 // pred_check
      _
    $region19: #{tpu_custom_call.1} parent=1 // pred_check_branch
      %54 = sbr.rel (0) target = $region21
    $region20: #{tpu_custom_call.1} parent=1 // pred_region
      %55 = dma.done [#allocation4], 256
    $region21: #{tpu_custom_call.1} parent=1 // pred_fallthru
      _
    %56 = vsyncpa [#allocation3], 1
    %57 = vsyncpa [#allocation4], 1

</llo_original>
